<compile_context>
chip_gen: v6e
topology: v6e:2x2x1
jax: 0.10.0
libtpu: 0.0.40
codegen_flags: <defaults>
</compile_context>

<pallas_src>
import math

import numpy as np
import jax
import jax.numpy as jnp
from jax.experimental import pallas as pl
from jax.experimental.pallas import tpu as pltpu

_LANE = 128
_SUBLANE = 8
_HALF_PI = math.pi / 2.0

# Cephes sinf/cosf core polynomials, valid on |phi| <= pi/4 (f32 accurate).
_S1 = -1.6666654611e-1
_S2 = 8.3321608736e-3
_S3 = -1.9515295891e-4
_C1 = 4.166664568298827e-2
_C2 = -1.388731625493765e-3
_C3 = 2.443315711809948e-5


def _round_up(v, m):
    return ((v + m - 1) // m) * m


def _sincos_2pi(p):
    """Returns (sin(2*pi*p), cos(2*pi*p)) with one shared range reduction in p-space.

    2*pi*p == (pi/2) * t with t = 4*p (exact power-of-two scale). k = nearest int to
    t gives the quadrant; f = t - k is computed exactly in f32, so the reduced
    argument phi = (pi/2)*f keeps near-full f32 accuracy even for |p| in the hundreds.
    """
    t = 4.0 * p                                   # exact
    k = jnp.floor(t + 0.5)                        # nearest integer (as float)
    f = t - k                                     # exact, |f| <= 0.5 (+1 ulp corner)
    phi = f * _HALF_PI                            # |phi| <= pi/4

    z = phi * phi
    s = phi * (1.0 + z * (_S1 + z * (_S2 + z * _S3)))           # sin(phi)
    c = 1.0 - 0.5 * z + (z * z) * (_C1 + z * (_C2 + z * _C3))   # cos(phi)

    # Quadrant selection (int32 is ample for realistic |proj| < 2^29).
    q = k.astype(jnp.int32) & 3
    swap = (q & 1) == 1                            # odd quadrant: swap sin/cos
    sin_v = jnp.where(swap, c, s)
    cos_v = jnp.where(swap, s, c)
    sin_v = jnp.where((q & 2) == 2, -sin_v, sin_v)         # q in {2,3}: negate sin
    cos_v = jnp.where(((q + 1) & 2) == 2, -cos_v, cos_v)   # q in {1,2}: negate cos
    return sin_v, cos_v


def _gff_kernel(x_ref, b_ref, o_ref):
    # x_ref: (tr, Cp)      flattened (zero-padded) input rows
    # b_ref: (Cp, Mp)      random projection matrix (resident in VMEM)
    # o_ref: (tr, 2*Mp)    [sin(theta) | cos(theta)], both slabs lane-aligned
    x = x_ref[...]
    b = b_ref[...]
    Mp = b.shape[1]

    if x.shape[1] == 1:
        # K == 1: a single VPU broadcast multiply beats an MXU round trip.
        proj = x * b                                           # (tr,1)*(1,Mp)->(tr,Mp)
    else:
        # Offload the tiny-K projection to the idle MXU; HIGHEST = full-f32 contract
        # so the trig argument keeps f32 accuracy.
        proj = jnp.dot(x, b, preferred_element_type=jnp.float32,
                       precision=jax.lax.Precision.HIGHEST)

    sin_v, cos_v = _sincos_2pi(proj)
    o_ref[:, :Mp] = sin_v.astype(o_ref.dtype)
    o_ref[:, Mp:] = cos_v.astype(o_ref.dtype)


def gaussian_fourier_features(x, b_matrix, *, tile_rows=2048, out_dtype=jnp.float32):
    """
    x:         (B, L, C) float  (or (B, L) when num_input_channels == 1)
    b_matrix:  (C, M)    float  -- fixed random projection (torch.randn * scale)
    returns    (B, L, 2*M) == concat([sin(2*pi*x@B), cos(2*pi*x@B)], axis=-1)
    """
    if x.ndim == 2:                       # num_input_channels == 1 path (unsqueeze(-1))
        x = x[..., None]
    Bsz, L, C = x.shape
    Cb, M = b_matrix.shape
    assert C == Cb, "channel mismatch between x and the projection matrix"
    R = Bsz * L

    x2 = x.reshape(R, C).astype(jnp.float32)
    b2 = b_matrix.astype(jnp.float32)

    # Lane-pad the mapping size so BOTH sin/cos slabs store as unmasked full-width vst.
    Mp = _round_up(max(M, _LANE), _LANE)
    if Mp != M:
        b2 = jnp.pad(b2, ((0, 0), (0, Mp - M)))

    # Sublane-pad channels for the MXU path (zero columns/rows contribute nothing).
    Cp = C if C == 1 else _round_up(C, _SUBLANE)
    if Cp != C:
        x2 = jnp.pad(x2, ((0, 0), (0, Cp - C)))
        b2 = jnp.pad(b2, ((0, Cp - C), (0, 0)))

    # Sublane-pad rows (tiny input-side pad; partial last tile is masked by Pallas).
    R8 = _round_up(max(R, _SUBLANE), _SUBLANE)
    if R8 != R:
        x2 = jnp.pad(x2, ((0, R8 - R), (0, 0)))

    out_itemsize = jnp.dtype(out_dtype).itemsize

    # ---- row-tile sizing (double-buffered VMEM blocks) -----------------------------
    #   input block  (tr, Cp): each row lane-pads to a 128-lane f32 tile -> 512 B/row/buf
    #   output block (tr, 2*Mp)                                          -> 2*Mp*itemsize
    in_row_bytes = max(Cp, _LANE) * 4
    bytes_per_row = 2 * in_row_bytes + 2 * (2 * Mp * out_itemsize)
    vmem_block_budget = 20 * 1024 * 1024          # safe on v5e/v6e/v7x scoped VMEM
    cap = max(_SUBLANE, (vmem_block_budget // bytes_per_row) // _SUBLANE * _SUBLANE)

    tr = _round_up(min(tile_rows, R8), _SUBLANE)
    tr = min(tr, cap)
    if R8 >= 2 * _SUBLANE:
        # Keep >= 2 grid steps so the "parallel" axis can feed both TensorCores (v7x).
        tr = min(tr, _round_up(pl.cdiv(R8, 2), _SUBLANE))
    tr = max(_SUBLANE, min(tr, R8))

    grid = (pl.cdiv(R8, tr),)

    cost = pl.CostEstimate(
        flops=2 * R8 * Cp * Mp + 30 * R8 * Mp,     # matmul + joint sincos polynomials
        transcendentals=0,
        bytes_accessed=4 * (R8 * Cp + Cp * Mp) + R8 * 2 * Mp * out_itemsize,
    )

    out = pl.pallas_call(
        _gff_kernel,
        out_shape=jax.ShapeDtypeStruct((R8, 2 * Mp), out_dtype),
        grid_spec=pl.GridSpec(
            grid=grid,
            in_specs=[
                pl.BlockSpec((tr, Cp), lambda i: (i, 0)),    # row tile of inputs
                pl.BlockSpec((Cp, Mp), lambda i: (0, 0)),    # resident projection matrix
            ],
            out_specs=pl.BlockSpec((tr, 2 * Mp), lambda i: (i, 0)),
        ),
        compiler_params=pltpu.CompilerParams(
            dimension_semantics=("parallel",),
            vmem_limit_bytes=48 * 1024 * 1024,
        ),
        cost_estimate=cost,
    )(x2, b2)

    if R8 != R:
        out = out[:R]
    if Mp != M:
        out = jnp.concatenate([out[:, :M], out[:, Mp:Mp + M]], axis=-1)
    return out.reshape(Bsz, L, 2 * M)


if __name__ == "__main__":
    # Small demo shapes consistent with the module (default mapping_size=256 is also a
    # multiple of 128; any M works via the internal lane padding).
    num_input_channels = 4
    mapping_size = 128
    scale = 10.0

    key = jax.random.PRNGKey(0)
    kx, kb = jax.random.split(key)
    x = jax.random.normal(kx, (2, 8, num_input_channels), dtype=jnp.float32)
    b_matrix = scale * jax.random.normal(
        kb, (num_input_channels, mapping_size), dtype=jnp.float32)

    out = gaussian_fourier_features(x, b_matrix)
    out = jax.block_until_ready(out)
    assert out.shape == (2, 8, 2 * mapping_size)

    # Ground-truth reference in float64 numpy.
    x64 = np.asarray(x, dtype=np.float64).reshape(-1, num_input_channels)
    b64 = np.asarray(b_matrix, dtype=np.float64)
    theta = 2.0 * np.pi * (x64 @ b64)
    ref = np.concatenate([np.sin(theta), np.cos(theta)], axis=-1)
    ref = ref.reshape(2, 8, 2 * mapping_size)

    # The proj-space reduction keeps near-full f32 accuracy even though |theta|
    # reaches a few hundred; the residual error is dominated by f32 rounding of the
    # projection itself (~1e-5), so 1e-3 passes with wide margin.
    np.testing.assert_allclose(np.asarray(out, dtype=np.float64), ref,
                               rtol=1e-3, atol=1e-3)
    print("KERNEL_OK")
</pallas_src>

<mosaic_0001>
module attributes {stable_mosaic.version = 11 : i64} {
  func.func @_gff_kernel(%arg0: i32, %arg1: memref<8x8xf32, #tpu.memory_space<vmem>>, %arg2: memref<8x128xf32, #tpu.memory_space<vmem>>, %arg3: memref<8x256xf32, #tpu.memory_space<vmem>>) attributes {dimension_semantics = [#tpu.dimension_semantics<parallel>], iteration_bounds = array<i64: 2>, scalar_prefetch = 0 : i64, scratch_operands = 0 : i64, tpu.core_type = #tpu.core_type<tc>, window_params = [{transform_indices = @transform_0, window_bounds = array<i64: 8, 8>}, {pipeline_mode = #tpu.pipeline_mode<synchronous>, transform_indices = @transform_1, window_bounds = array<i64: 8, 128>}, {transform_indices = @transform_2, window_bounds = array<i64: 8, 256>}]} {
    %c0 = arith.constant 0 : index
    %c0_0 = arith.constant 0 : index
    %0 = vector.load %arg1[%c0, %c0_0] : memref<8x8xf32, #tpu.memory_space<vmem>>, vector<8x8xf32>
    %c0_1 = arith.constant 0 : index
    %c0_2 = arith.constant 0 : index
    %1 = vector.load %arg2[%c0_1, %c0_2] : memref<8x128xf32, #tpu.memory_space<vmem>>, vector<8x128xf32>
    %cst = arith.constant dense<0.000000e+00> : vector<8x128xf32>
    %2 = tpu.matmul %0, %1, %cst {dimension_numbers = #tpu.dot_dimension_numbers<[1], [0], [0], [1], [0, 0, 1, 1], [], []>, precision = #tpu.contract_precision<fp32>} : vector<8x8xf32>, vector<8x128xf32>, vector<8x128xf32> -> vector<8x128xf32>
    %cst_3 = arith.constant 4.000000e+00 : f32
    %3 = vector.broadcast %cst_3 : f32 to vector<8x128xf32>
    %4 = arith.mulf %3, %2 : vector<8x128xf32>
    %cst_4 = arith.constant 5.000000e-01 : f32
    %5 = vector.broadcast %cst_4 : f32 to vector<8x128xf32>
    %6 = arith.addf %4, %5 : vector<8x128xf32>
    %7 = math.floor %6 : vector<8x128xf32>
    %8 = arith.subf %4, %7 : vector<8x128xf32>
    %cst_5 = arith.constant 1.57079637 : f32
    %9 = vector.broadcast %cst_5 : f32 to vector<8x128xf32>
    %10 = arith.mulf %8, %9 : vector<8x128xf32>
    %11 = arith.mulf %10, %10 : vector<8x128xf32>
    %cst_6 = arith.constant -1.95152956E-4 : f32
    %12 = vector.broadcast %cst_6 : f32 to vector<8x128xf32>
    %13 = arith.mulf %11, %12 : vector<8x128xf32>
    %cst_7 = arith.constant 0.00833216123 : f32
    %14 = vector.broadcast %cst_7 : f32 to vector<8x128xf32>
    %15 = arith.addf %14, %13 : vector<8x128xf32>
    %16 = arith.mulf %11, %15 : vector<8x128xf32>
    %cst_8 = arith.constant -0.166666552 : f32
    %17 = vector.broadcast %cst_8 : f32 to vector<8x128xf32>
    %18 = arith.addf %17, %16 : vector<8x128xf32>
    %19 = arith.mulf %11, %18 : vector<8x128xf32>
    %cst_9 = arith.constant 1.000000e+00 : f32
    %20 = vector.broadcast %cst_9 : f32 to vector<8x128xf32>
    %21 = arith.addf %20, %19 : vector<8x128xf32>
    %22 = arith.mulf %10, %21 : vector<8x128xf32>
    %cst_10 = arith.constant 5.000000e-01 : f32
    %23 = vector.broadcast %cst_10 : f32 to vector<8x128xf32>
    %24 = arith.mulf %23, %11 : vector<8x128xf32>
    %cst_11 = arith.constant 1.000000e+00 : f32
    %25 = vector.broadcast %cst_11 : f32 to vector<8x128xf32>
    %26 = arith.subf %25, %24 : vector<8x128xf32>
    %27 = arith.mulf %11, %11 : vector<8x128xf32>
    %cst_12 = arith.constant 2.44331568E-5 : f32
    %28 = vector.broadcast %cst_12 : f32 to vector<8x128xf32>
    %29 = arith.mulf %11, %28 : vector<8x128xf32>
    %cst_13 = arith.constant -0.00138873165 : f32
    %30 = vector.broadcast %cst_13 : f32 to vector<8x128xf32>
    %31 = arith.addf %30, %29 : vector<8x128xf32>
    %32 = arith.mulf %11, %31 : vector<8x128xf32>
    %cst_14 = arith.constant 0.0416666456 : f32
    %33 = vector.broadcast %cst_14 : f32 to vector<8x128xf32>
    %34 = arith.addf %33, %32 : vector<8x128xf32>
    %35 = arith.mulf %27, %34 : vector<8x128xf32>
    %36 = arith.addf %26, %35 : vector<8x128xf32>
    %37 = arith.fptosi %7 : vector<8x128xf32> to vector<8x128xi32>
    %c3_i32 = arith.constant 3 : i32
    %38 = vector.broadcast %c3_i32 : i32 to vector<8x128xi32>
    %39 = arith.andi %37, %38 : vector<8x128xi32>
    %c1_i32 = arith.constant 1 : i32
    %40 = vector.broadcast %c1_i32 : i32 to vector<8x128xi32>
    %41 = arith.andi %39, %40 : vector<8x128xi32>
    %c1_i32_15 = arith.constant 1 : i32
    %42 = vector.broadcast %c1_i32_15 : i32 to vector<8x128xi32>
    %43 = arith.cmpi eq, %41, %42 : vector<8x128xi32>
    %44 = arith.select %43, %36, %22 : vector<8x128xi1>, vector<8x128xf32>
    %45 = arith.select %43, %22, %36 : vector<8x128xi1>, vector<8x128xf32>
    %c2_i32 = arith.constant 2 : i32
    %46 = vector.broadcast %c2_i32 : i32 to vector<8x128xi32>
    %47 = arith.andi %39, %46 : vector<8x128xi32>
    %c2_i32_16 = arith.constant 2 : i32
    %48 = vector.broadcast %c2_i32_16 : i32 to vector<8x128xi32>
    %49 = arith.cmpi eq, %47, %48 : vector<8x128xi32>
    %cst_17 = arith.constant 0.000000e+00 : f32
    %50 = vector.broadcast %cst_17 : f32 to vector<8x128xf32>
    %51 = arith.subf %50, %44 : vector<8x128xf32>
    %52 = arith.select %49, %51, %44 : vector<8x128xi1>, vector<8x128xf32>
    %c1_i32_18 = arith.constant 1 : i32
    %53 = vector.broadcast %c1_i32_18 : i32 to vector<8x128xi32>
    %54 = arith.addi %39, %53 : vector<8x128xi32>
    %c2_i32_19 = arith.constant 2 : i32
    %55 = vector.broadcast %c2_i32_19 : i32 to vector<8x128xi32>
    %56 = arith.andi %54, %55 : vector<8x128xi32>
    %c2_i32_20 = arith.constant 2 : i32
    %57 = vector.broadcast %c2_i32_20 : i32 to vector<8x128xi32>
    %58 = arith.cmpi eq, %56, %57 : vector<8x128xi32>
    %cst_21 = arith.constant 0.000000e+00 : f32
    %59 = vector.broadcast %cst_21 : f32 to vector<8x128xf32>
    %60 = arith.subf %59, %45 : vector<8x128xf32>
    %61 = arith.select %58, %60, %45 : vector<8x128xi1>, vector<8x128xf32>
    %c0_22 = arith.constant 0 : index
    %c0_23 = arith.constant 0 : index
    %62 = vector.load %arg3[%c0_22, %c0_23] : memref<8x256xf32, #tpu.memory_space<vmem>>, vector<8x128xf32>
    tpu.vector_store %arg3[%c0_22, %c0_23], %52 {strides = array<i32>} : memref<8x256xf32, #tpu.memory_space<vmem>>, vector<8x128xf32>,
    %c0_24 = arith.constant 0 : index
    %c128 = arith.constant 128 : index
    %63 = vector.load %arg3[%c0_24, %c128] : memref<8x256xf32, #tpu.memory_space<vmem>>, vector<8x128xf32>
    tpu.vector_store %arg3[%c0_24, %c128], %61 {strides = array<i32>} : memref<8x256xf32, #tpu.memory_space<vmem>>, vector<8x128xf32>,
    return
  }
  func.func @transform_0(%arg0: i32) -> (i32, i32) {
    %c0_i32 = arith.constant 0 : i32
    %c0_i32_0 = arith.constant 0 : i32
    return %arg0, %c0_i32 : i32, i32
  }
  func.func @transform_1(%arg0: i32) -> (i32, i32) {
    %c0_i32 = arith.constant 0 : i32
    %c0_i32_0 = arith.constant 0 : i32
    %c0_i32_1 = arith.constant 0 : i32
    return %c0_i32, %c0_i32_0 : i32, i32
  }
  func.func @transform_2(%arg0: i32) -> (i32, i32) {
    %c0_i32 = arith.constant 0 : i32
    %c0_i32_0 = arith.constant 0 : i32
    return %arg0, %c0_i32 : i32, i32
  }
}

</mosaic_0001>

<llo_original>
// kernel: tpu_custom_call.1
$region0: #{tpu_custom_call.1}
  #allocation0 [shape = 'u32[]', space=smem, size = 0x4, offset = 0x4, fixed_abs, tag = 'smem constant byte address 0x4 - core index']
  #allocation1 [shape = 'u32[144,128]{1,0:T(1,128)}', space=vmem, size = 0x12000, scoped, tag = 'internal scratch']
  %s0 = inlined_call_operand.vmem [shape: f32[16,8], index: 0, kind: input, shape index: {}]
  %s1 = inlined_call_operand.vmem [shape: f32[8,128], index: 1, kind: input, shape index: {}]
  %s2 = inlined_call_operand.hbm [shape: f32[16,256], index: 2, kind: output, shape index: {}]
  %s3 = sld [smem:[#allocation0]]
  $region41: #{tpu_custom_call.1} parent=0
    _
  %s5 = ssub.s32 1, %s3
  %s6 = scalar_select 0, %s5, %s3
  $region1: #{tpu_custom_call.1} parent=0
    #allocation2 [shape = 'u8[16384]{0}', space=vmem, size = 0x4000, scoped, tag = 'output window, operand 0']
    #allocation3 [shape = 's32[2]{0}', space=sflag, size = 0x8, scoped, tag = 'scoped memory for tpu_custom_call.1']
    %7 = vsyncpa [#allocation3], 0
    %s8 = scalar_lea.sflag [#allocation3], 1
    %9 = vsyncpa %s8, 0
    loop: start=0, step=1, limit=4
    $region2: #{tpu_custom_call.1} parent=1 // loop_pre_header
      _
    $region3: #{tpu_custom_call.1} parent=1 // loop_header
      %s11 = sphi 0, %s15
      %p12 = scmp.ge.s32.totalorder %s11, 4
      %s21 = sphi 0, %s23
      %s24 = sphi 0, %s21
      %s25 = sphi 0, %s24
      %s41 = sphi 0, %s25
      %s45 = sphi 0, %s45
      %s47 = sphi 0, %s45
      %s48 = sphi 0, %s47
      %s62 = sphi 0, %s48
      %s68 = sphi 0, %s70
      %s71 = sphi 0, %s68
      %s72 = sphi 0, %s71
      %s88 = sphi 0, %s72
    $region4: #{tpu_custom_call.1} parent=1 // loop_header_branch
      %14 = sbr.rel (%p12) target = $region8
    $region5: #{tpu_custom_call.1} parent=1 // loop_body
      %s16 = ssub.s32 %s11, 1
      %s17 = ssub.s32 %s11, 2
      %s18 = sadd.s32 %s11, 1
      %s19 = ssub.s32 %s11, %s18
      %p20 = scmp.eq.s32.totalorder %s19, 0
      %s22 = sadd.s32 %s21, 1
      %s23 = scalar_select %p20, %s21, %s22
      %p26 = pneg %p20
      %p27 = scmp.eq.s32.totalorder %s11, 1
      %p28 = por %p26, %p27
      %p29 = scmp.ne.s32.totalorder %s21, %s24
      %p30 = scmp.eq.s32.totalorder %s11, 0
      %p31 = por %p29, %p30
      %p32 = scmp.ne.s32.totalorder %s21, %s24
      %p33 = scmp.eq.s32.totalorder %s16, 1
      %p34 = por %p32, %p33
      %p35 = scmp.ne.s32.totalorder %s24, %s25
      %p36 = scmp.eq.s32.totalorder %s16, 0
      %p37 = por %p35, %p36
      %p38 = scmp.ne.s32.totalorder %s24, %s25
      %p39 = scmp.eq.s32.totalorder %s17, 1
      %p40 = por %p38, %p39
      %p42 = scmp.ne.s32.totalorder %s25, %s41
      %p43 = scmp.eq.s32.totalorder %s17, 0
      %p44 = por %p42, %p43
      %s46 = sadd.s32 %s45, 1
      %p49 = scmp.eq.s32.totalorder %s11, 1
      %p50 = scmp.ne.s32.totalorder %s45, %s47
      %p51 = scmp.eq.s32.totalorder %s11, 0
      %p52 = por %p50, %p51
      %p53 = scmp.ne.s32.totalorder %s45, %s47
      %p54 = scmp.eq.s32.totalorder %s16, 1
      %p55 = por %p53, %p54
      %p56 = scmp.ne.s32.totalorder %s47, %s48
      %p57 = scmp.eq.s32.totalorder %s16, 0
      %p58 = por %p56, %p57
      %p59 = scmp.ne.s32.totalorder %s47, %s48
      %p60 = scmp.eq.s32.totalorder %s17, 1
      %p61 = por %p59, %p60
      %p63 = scmp.ne.s32.totalorder %s48, %s62
      %p64 = scmp.eq.s32.totalorder %s17, 0
      %p65 = por %p63, %p64
      %s66 = ssub.s32 %s11, %s18
      %p67 = scmp.eq.s32.totalorder %s66, 0
      %s69 = sadd.s32 %s68, 1
      %s70 = scalar_select %p67, %s68, %s69
      %p73 = pneg %p67
      %p74 = scmp.eq.s32.totalorder %s11, 1
      %p75 = por %p73, %p74
      %p76 = scmp.ne.s32.totalorder %s68, %s71
      %p77 = scmp.eq.s32.totalorder %s11, 0
      %p78 = por %p76, %p77
      %p79 = scmp.ne.s32.totalorder %s68, %s71
      %p80 = scmp.eq.s32.totalorder %s16, 1
      %p81 = por %p79, %p80
      %p82 = scmp.ne.s32.totalorder %s71, %s72
      %p83 = scmp.eq.s32.totalorder %s16, 0
      %p84 = por %p82, %p83
      %p85 = scmp.ne.s32.totalorder %s71, %s72
      %p86 = scmp.eq.s32.totalorder %s17, 1
      %p87 = por %p85, %p86
      %p89 = scmp.ne.s32.totalorder %s72, %s88
      %p90 = scmp.eq.s32.totalorder %s17, 0
      %p91 = por %p89, %p90
      %p92 = scmp.le.s32.totalorder 1, %s11
      %p93 = scmp.lt.s32.totalorder %s11, 3
      %p94 = pnand %p92, %p93
      %p95 = pneg %p94
      // Predicated region
      $region9: #{tpu_custom_call.1} parent=5 // pred_check
        _
      $region10: #{tpu_custom_call.1} parent=5 // pred_check_branch
        %97 = sbr.rel (%p94) target = $region12
      $region11: #{tpu_custom_call.1} parent=5 // pred_region
        %s98 = ssub.s32 %s11, 1
        // Predicated region
        $region13: #{tpu_custom_call.1} parent=11 // pred_check
          %p99 = pneg %p58
        $region14: #{tpu_custom_call.1} parent=11 // pred_check_branch
          %101 = sbr.rel (%p99) target = $region16
        $region15: #{tpu_custom_call.1} parent=11 // pred_region
          _
        $region16: #{tpu_custom_call.1} parent=11 // pred_fallthru
          _
      $region12: #{tpu_custom_call.1} parent=5 // pred_fallthru
        _
      %p102 = scmp.lt.s32.totalorder %s11, 2
      // Predicated region
      $region17: #{tpu_custom_call.1} parent=5 // pred_check
        %p103 = pneg %p102
      $region18: #{tpu_custom_call.1} parent=5 // pred_check_branch
        %105 = sbr.rel (%p103) target = $region20
      $region19: #{tpu_custom_call.1} parent=5 // pred_region
        // Predicated region
        $region21: #{tpu_custom_call.1} parent=19 // pred_check
          %p106 = pneg %p31
        $region22: #{tpu_custom_call.1} parent=19 // pred_check_branch
          %108 = sbr.rel (%p106) target = $region24
        $region23: #{tpu_custom_call.1} parent=19 // pred_region
          %p109 = scmp.lt.s32.totalorder %s11, 1
          %s110 = scalar_select %p109, %s11, 1
          %s111 = smul.addr %s110, 8
          %s112 = scalar_lea.vmem %s0, %s111
        $region24: #{tpu_custom_call.1} parent=19 // pred_fallthru
          _
      $region20: #{tpu_custom_call.1} parent=5 // pred_fallthru
        _
      %p113 = scmp.le.s32.totalorder 1, %s11
      %p114 = scmp.lt.s32.totalorder %s11, 3
      %p115 = pnand %p113, %p114
      %p116 = pneg %p115
      // Predicated region
      $region25: #{tpu_custom_call.1} parent=5 // pred_check
        _
      $region26: #{tpu_custom_call.1} parent=5 // pred_check_branch
        %118 = sbr.rel (%p115) target = $region28
      $region27: #{tpu_custom_call.1} parent=5 // pred_region
        %s119 = ssub.s32 %s11, 1
        %p120 = scmp.lt.s32.totalorder %s16, 1
        %s121 = scalar_select %p120, %s16, 1
        %s122 = smul.addr %s121, 8
        %s123 = scalar_lea.vmem %s0, %s122
        %p124 = pneg %p37
        %p125 = pneg %p34
        %p126 = pneg %p58
        %p127 = pneg %p55
        %p128 = pneg %p84
        %p129 = pneg %p81
        %s130 = sand.u32 %s71, 1
        %s131 = scalar_lea.sflag [#allocation3], %s130
        %s132 = sand.u32 %s71, 1
        %s133 = smul.addr %s132, 16
        %s134 = scalar_lea.vmem [#allocation2], %s133
        %p135 = scmp.lt.s32.totalorder %s16, 1
        %s136 = scalar_select %p135, %s16, 1
        %s137 = smul.addr %s136, 8
        %s138 = scalar_lea.vmem %s0, %s137
        %v139 = vld [vmem:[%s138] sm:$0xff]
        %v140 = vld [vmem:[%s1] sm:$0xff]
        %vm141 = vcmask 64512
        %v143 = vsel %vm141, %v139, 0
        %145 = vmatprep.subr.mxu0 0.0
        %146 = vmatpush1.msra.mxu0 0.0
        %147 = vmatprep.subr.mxu0 0.0
        %148 = vmatpush1.msra.mxu0 0.0
        %149 = vmatprep.subr.mxu0 0.0
        %150 = vmatpush1.msra.mxu0 0.0
        %151 = vmatprep.subr.mxu0 0.0
        %152 = vmatpush1.msra.mxu0 0.0
        %153 = vmatprep.subr.mxu0 0.0
        %154 = vmatpush1.msra.mxu0 0.0
        %155 = vmatprep.subr.mxu0 0.0
        %156 = vmatpush1.msra.mxu0 0.0
        %157 = vmatprep.subr.mxu0 0.0
        %158 = vmatpush1.msra.mxu0 0.0
        %159 = vmatprep.subr.mxu0 0.0
        %160 = vmatpush1.msra.mxu0 0.0
        %161 = vmatprep.subr.mxu0 0.0
        %162 = vmatpush1.msra.mxu0 0.0
        %163 = vmatprep.subr.mxu0 0.0
        %164 = vmatpush1.msra.mxu0 0.0
        %165 = vmatprep.subr.mxu0 0.0
        %166 = vmatpush1.msra.mxu0 0.0
        %167 = vmatprep.subr.mxu0 0.0
        %168 = vmatpush1.msra.mxu0 0.0
        %169 = vmatprep.subr.mxu0 0.0
        %170 = vmatpush1.msra.mxu0 0.0
        %171 = vmatprep.subr.mxu0 0.0
        %172 = vmatpush1.msra.mxu0 0.0
        %173 = vmatprep.subr.mxu0 0.0
        %174 = vmatpush1.msra.mxu0 0.0
        %175 = vmatprep.subr.mxu0 0.0
        %v176 = vand.u32 %v140, 4294901760
        %177 = vmatpush1.msra.mxu0 %v176
        %178 = vmatprep.subr.mxu0 0.0
        %179 = vmatpush2.msra.mxu0 0.0
        %180 = vmatprep.subr.mxu0 0.0
        %181 = vmatpush2.msra.mxu0 0.0
        %182 = vmatprep.subr.mxu0 0.0
        %183 = vmatpush2.msra.mxu0 0.0
        %184 = vmatprep.subr.mxu0 0.0
        %185 = vmatpush2.msra.mxu0 0.0
        %186 = vmatprep.subr.mxu0 0.0
        %187 = vmatpush2.msra.mxu0 0.0
        %188 = vmatprep.subr.mxu0 0.0
        %189 = vmatpush2.msra.mxu0 0.0
        %190 = vmatprep.subr.mxu0 0.0
        %191 = vmatpush2.msra.mxu0 0.0
        %192 = vmatprep.subr.mxu0 0.0
        %193 = vmatpush2.msra.mxu0 0.0
        %194 = vmatprep.subr.mxu0 0.0
        %195 = vmatpush2.msra.mxu0 0.0
        %196 = vmatprep.subr.mxu0 0.0
        %197 = vmatpush2.msra.mxu0 0.0
        %198 = vmatprep.subr.mxu0 0.0
        %199 = vmatpush2.msra.mxu0 0.0
        %200 = vmatprep.subr.mxu0 0.0
        %201 = vmatpush2.msra.mxu0 0.0
        %202 = vmatprep.subr.mxu0 0.0
        %203 = vmatpush2.msra.mxu0 0.0
        %204 = vmatprep.subr.mxu0 0.0
        %205 = vmatpush2.msra.mxu0 0.0
        %206 = vmatprep.subr.mxu0 0.0
        %207 = vmatpush2.msra.mxu0 0.0
        %208 = vmatprep.subr.mxu0 0.0
        %209 = vmatpush2.msra.mxu0 0.0
        %210 = vmatprep.mubr.f32.mxu0 0.0
        %v211 = vand.u32 %v143, 4294901760
        %v212 = vsub.f32 %v143, %v211
        %v213 = vand.u32 %v212, 4294901760
        %v214 = vsub.f32 %v212, %v213
        %v215 = vand.u32 %v214, 4294901760
        %216 = vmatmul.mubr.f32.gmra.mxu0 %v215
        %v217 = vpop.f32.mrf.mxu0
        %v218 = vadd.f32 0.0, %v217
        %v219 = vpop.f32.mrf.mxu0
        %220 = vdwg.mxu0
        %221 = vmatprep.subr.mxu0 0.0
        %222 = vmatpush1.msra.mxu0 0.0
        %223 = vmatprep.subr.mxu0 0.0
        %224 = vmatpush1.msra.mxu0 0.0
        %225 = vmatprep.subr.mxu0 0.0
        %226 = vmatpush1.msra.mxu0 0.0
        %227 = vmatprep.subr.mxu0 0.0
        %228 = vmatpush1.msra.mxu0 0.0
        %229 = vmatprep.subr.mxu0 0.0
        %230 = vmatpush1.msra.mxu0 0.0
        %231 = vmatprep.subr.mxu0 0.0
        %232 = vmatpush1.msra.mxu0 0.0
        %233 = vmatprep.subr.mxu0 0.0
        %234 = vmatpush1.msra.mxu0 0.0
        %235 = vmatprep.subr.mxu0 0.0
        %236 = vmatpush1.msra.mxu0 0.0
        %237 = vmatprep.subr.mxu0 0.0
        %238 = vmatpush1.msra.mxu0 0.0
        %239 = vmatprep.subr.mxu0 0.0
        %240 = vmatpush1.msra.mxu0 0.0
        %241 = vmatprep.subr.mxu0 0.0
        %242 = vmatpush1.msra.mxu0 0.0
        %243 = vmatprep.subr.mxu0 0.0
        %244 = vmatpush1.msra.mxu0 0.0
        %245 = vmatprep.subr.mxu0 0.0
        %246 = vmatpush1.msra.mxu0 0.0
        %247 = vmatprep.subr.mxu0 0.0
        %248 = vmatpush1.msra.mxu0 0.0
        %249 = vmatprep.subr.mxu0 0.0
        %250 = vmatpush1.msra.mxu0 0.0
        %251 = vmatprep.subr.mxu0 0.0
        %v252 = vand.u32 %v140, 4294901760
        %v253 = vsub.f32 %v140, %v252
        %v254 = vand.u32 %v253, 4294901760
        %v255 = vsub.f32 %v253, %v254
        %v256 = vand.u32 %v255, 4294901760
        %257 = vmatpush1.msra.mxu0 %v256
        %258 = vmatprep.subr.mxu0 0.0
        %259 = vmatpush2.msra.mxu0 0.0
        %260 = vmatprep.subr.mxu0 0.0
        %261 = vmatpush2.msra.mxu0 0.0
        %262 = vmatprep.subr.mxu0 0.0
        %263 = vmatpush2.msra.mxu0 0.0
        %264 = vmatprep.subr.mxu0 0.0
        %265 = vmatpush2.msra.mxu0 0.0
        %266 = vmatprep.subr.mxu0 0.0
        %267 = vmatpush2.msra.mxu0 0.0
        %268 = vmatprep.subr.mxu0 0.0
        %269 = vmatpush2.msra.mxu0 0.0
        %270 = vmatprep.subr.mxu0 0.0
        %271 = vmatpush2.msra.mxu0 0.0
        %272 = vmatprep.subr.mxu0 0.0
        %273 = vmatpush2.msra.mxu0 0.0
        %274 = vmatprep.subr.mxu0 0.0
        %275 = vmatpush2.msra.mxu0 0.0
        %276 = vmatprep.subr.mxu0 0.0
        %277 = vmatpush2.msra.mxu0 0.0
        %278 = vmatprep.subr.mxu0 0.0
        %279 = vmatpush2.msra.mxu0 0.0
        %280 = vmatprep.subr.mxu0 0.0
        %281 = vmatpush2.msra.mxu0 0.0
        %282 = vmatprep.subr.mxu0 0.0
        %283 = vmatpush2.msra.mxu0 0.0
        %284 = vmatprep.subr.mxu0 0.0
        %285 = vmatpush2.msra.mxu0 0.0
        %286 = vmatprep.subr.mxu0 0.0
        %287 = vmatpush2.msra.mxu0 0.0
        %288 = vmatprep.subr.mxu0 0.0
        %289 = vmatpush2.msra.mxu0 0.0
        %290 = vmatprep.mubr.f32.mxu0 0.0
        %v291 = vand.u32 %v143, 4294901760
        %292 = vmatmul.mubr.f32.gmra.mxu0 %v291
        %v293 = vpop.f32.mrf.mxu0
        %v294 = vadd.f32 %v218, %v293
        %v295 = vpop.f32.mrf.mxu0
        %296 = vdwg.mxu0
        %297 = vmatprep.subr.mxu0 0.0
        %298 = vmatpush1.msra.mxu0 0.0
        %299 = vmatprep.subr.mxu0 0.0
        %300 = vmatpush1.msra.mxu0 0.0
        %301 = vmatprep.subr.mxu0 0.0
        %302 = vmatpush1.msra.mxu0 0.0
        %303 = vmatprep.subr.mxu0 0.0
        %304 = vmatpush1.msra.mxu0 0.0
        %305 = vmatprep.subr.mxu0 0.0
        %306 = vmatpush1.msra.mxu0 0.0
        %307 = vmatprep.subr.mxu0 0.0
        %308 = vmatpush1.msra.mxu0 0.0
        %309 = vmatprep.subr.mxu0 0.0
        %310 = vmatpush1.msra.mxu0 0.0
        %311 = vmatprep.subr.mxu0 0.0
        %312 = vmatpush1.msra.mxu0 0.0
        %313 = vmatprep.subr.mxu0 0.0
        %314 = vmatpush1.msra.mxu0 0.0
        %315 = vmatprep.subr.mxu0 0.0
        %316 = vmatpush1.msra.mxu0 0.0
        %317 = vmatprep.subr.mxu0 0.0
        %318 = vmatpush1.msra.mxu0 0.0
        %319 = vmatprep.subr.mxu0 0.0
        %320 = vmatpush1.msra.mxu0 0.0
        %321 = vmatprep.subr.mxu0 0.0
        %322 = vmatpush1.msra.mxu0 0.0
        %323 = vmatprep.subr.mxu0 0.0
        %324 = vmatpush1.msra.mxu0 0.0
        %325 = vmatprep.subr.mxu0 0.0
        %326 = vmatpush1.msra.mxu0 0.0
        %327 = vmatprep.subr.mxu0 0.0
        %v328 = vand.u32 %v140, 4294901760
        %v329 = vsub.f32 %v140, %v328
        %330 = vmatpush1.msra.mxu0 %v329
        %331 = vmatprep.subr.mxu0 0.0
        %332 = vmatpush2.msra.mxu0 0.0
        %333 = vmatprep.subr.mxu0 0.0
        %334 = vmatpush2.msra.mxu0 0.0
        %335 = vmatprep.subr.mxu0 0.0
        %336 = vmatpush2.msra.mxu0 0.0
        %337 = vmatprep.subr.mxu0 0.0
        %338 = vmatpush2.msra.mxu0 0.0
        %339 = vmatprep.subr.mxu0 0.0
        %340 = vmatpush2.msra.mxu0 0.0
        %341 = vmatprep.subr.mxu0 0.0
        %342 = vmatpush2.msra.mxu0 0.0
        %343 = vmatprep.subr.mxu0 0.0
        %344 = vmatpush2.msra.mxu0 0.0
        %345 = vmatprep.subr.mxu0 0.0
        %346 = vmatpush2.msra.mxu0 0.0
        %347 = vmatprep.subr.mxu0 0.0
        %348 = vmatpush2.msra.mxu0 0.0
        %349 = vmatprep.subr.mxu0 0.0
        %350 = vmatpush2.msra.mxu0 0.0
        %351 = vmatprep.subr.mxu0 0.0
        %352 = vmatpush2.msra.mxu0 0.0
        %353 = vmatprep.subr.mxu0 0.0
        %354 = vmatpush2.msra.mxu0 0.0
        %355 = vmatprep.subr.mxu0 0.0
        %356 = vmatpush2.msra.mxu0 0.0
        %357 = vmatprep.subr.mxu0 0.0
        %358 = vmatpush2.msra.mxu0 0.0
        %359 = vmatprep.subr.mxu0 0.0
        %360 = vmatpush2.msra.mxu0 0.0
        %361 = vmatprep.subr.mxu0 0.0
        %362 = vmatpush2.msra.mxu0 0.0
        %363 = vmatprep.mubr.f32.mxu0 0.0
        %v364 = vand.u32 %v143, 4294901760
        %v365 = vsub.f32 %v143, %v364
        %366 = vmatmul.mubr.f32.gmra.mxu0 %v365
        %v367 = vpop.f32.mrf.mxu0
        %v368 = vadd.f32 %v294, %v367
        %v369 = vpop.f32.mrf.mxu0
        %370 = vdwg.mxu0
        %371 = vmatprep.subr.mxu0 0.0
        %372 = vmatpush1.msra.mxu0 0.0
        %373 = vmatprep.subr.mxu0 0.0
        %374 = vmatpush1.msra.mxu0 0.0
        %375 = vmatprep.subr.mxu0 0.0
        %376 = vmatpush1.msra.mxu0 0.0
        %377 = vmatprep.subr.mxu0 0.0
        %378 = vmatpush1.msra.mxu0 0.0
        %379 = vmatprep.subr.mxu0 0.0
        %380 = vmatpush1.msra.mxu0 0.0
        %381 = vmatprep.subr.mxu0 0.0
        %382 = vmatpush1.msra.mxu0 0.0
        %383 = vmatprep.subr.mxu0 0.0
        %384 = vmatpush1.msra.mxu0 0.0
        %385 = vmatprep.subr.mxu0 0.0
        %386 = vmatpush1.msra.mxu0 0.0
        %387 = vmatprep.subr.mxu0 0.0
        %388 = vmatpush1.msra.mxu0 0.0
        %389 = vmatprep.subr.mxu0 0.0
        %390 = vmatpush1.msra.mxu0 0.0
        %391 = vmatprep.subr.mxu0 0.0
        %392 = vmatpush1.msra.mxu0 0.0
        %393 = vmatprep.subr.mxu0 0.0
        %394 = vmatpush1.msra.mxu0 0.0
        %395 = vmatprep.subr.mxu0 0.0
        %396 = vmatpush1.msra.mxu0 0.0
        %397 = vmatprep.subr.mxu0 0.0
        %398 = vmatpush1.msra.mxu0 0.0
        %399 = vmatprep.subr.mxu0 0.0
        %400 = vmatpush1.msra.mxu0 0.0
        %401 = vmatprep.subr.mxu0 0.0
        %v402 = vand.u32 %v140, 4294901760
        %403 = vmatpush1.msra.mxu0 %v402
        %404 = vmatprep.subr.mxu0 0.0
        %405 = vmatpush2.msra.mxu0 0.0
        %406 = vmatprep.subr.mxu0 0.0
        %407 = vmatpush2.msra.mxu0 0.0
        %408 = vmatprep.subr.mxu0 0.0
        %409 = vmatpush2.msra.mxu0 0.0
        %410 = vmatprep.subr.mxu0 0.0
        %411 = vmatpush2.msra.mxu0 0.0
        %412 = vmatprep.subr.mxu0 0.0
        %413 = vmatpush2.msra.mxu0 0.0
        %414 = vmatprep.subr.mxu0 0.0
        %415 = vmatpush2.msra.mxu0 0.0
        %416 = vmatprep.subr.mxu0 0.0
        %417 = vmatpush2.msra.mxu0 0.0
        %418 = vmatprep.subr.mxu0 0.0
        %419 = vmatpush2.msra.mxu0 0.0
        %420 = vmatprep.subr.mxu0 0.0
        %421 = vmatpush2.msra.mxu0 0.0
        %422 = vmatprep.subr.mxu0 0.0
        %423 = vmatpush2.msra.mxu0 0.0
        %424 = vmatprep.subr.mxu0 0.0
        %425 = vmatpush2.msra.mxu0 0.0
        %426 = vmatprep.subr.mxu0 0.0
        %427 = vmatpush2.msra.mxu0 0.0
        %428 = vmatprep.subr.mxu0 0.0
        %429 = vmatpush2.msra.mxu0 0.0
        %430 = vmatprep.subr.mxu0 0.0
        %431 = vmatpush2.msra.mxu0 0.0
        %432 = vmatprep.subr.mxu0 0.0
        %433 = vmatpush2.msra.mxu0 0.0
        %434 = vmatprep.subr.mxu0 0.0
        %435 = vmatpush2.msra.mxu0 0.0
        %436 = vmatprep.mubr.f32.mxu0 0.0
        %v437 = vand.u32 %v143, 4294901760
        %v438 = vsub.f32 %v143, %v437
        %v439 = vand.u32 %v438, 4294901760
        %440 = vmatmul.mubr.f32.gmra.mxu0 %v439
        %v441 = vpop.f32.mrf.mxu0
        %v442 = vadd.f32 %v368, %v441
        %v443 = vpop.f32.mrf.mxu0
        %444 = vdwg.mxu0
        %445 = vmatprep.subr.mxu0 0.0
        %446 = vmatpush1.msra.mxu0 0.0
        %447 = vmatprep.subr.mxu0 0.0
        %448 = vmatpush1.msra.mxu0 0.0
        %449 = vmatprep.subr.mxu0 0.0
        %450 = vmatpush1.msra.mxu0 0.0
        %451 = vmatprep.subr.mxu0 0.0
        %452 = vmatpush1.msra.mxu0 0.0
        %453 = vmatprep.subr.mxu0 0.0
        %454 = vmatpush1.msra.mxu0 0.0
        %455 = vmatprep.subr.mxu0 0.0
        %456 = vmatpush1.msra.mxu0 0.0
        %457 = vmatprep.subr.mxu0 0.0
        %458 = vmatpush1.msra.mxu0 0.0
        %459 = vmatprep.subr.mxu0 0.0
        %460 = vmatpush1.msra.mxu0 0.0
        %461 = vmatprep.subr.mxu0 0.0
        %462 = vmatpush1.msra.mxu0 0.0
        %463 = vmatprep.subr.mxu0 0.0
        %464 = vmatpush1.msra.mxu0 0.0
        %465 = vmatprep.subr.mxu0 0.0
        %466 = vmatpush1.msra.mxu0 0.0
        %467 = vmatprep.subr.mxu0 0.0
        %468 = vmatpush1.msra.mxu0 0.0
        %469 = vmatprep.subr.mxu0 0.0
        %470 = vmatpush1.msra.mxu0 0.0
        %471 = vmatprep.subr.mxu0 0.0
        %472 = vmatpush1.msra.mxu0 0.0
        %473 = vmatprep.subr.mxu0 0.0
        %474 = vmatpush1.msra.mxu0 0.0
        %475 = vmatprep.subr.mxu0 0.0
        %v476 = vand.u32 %v140, 4294901760
        %v477 = vsub.f32 %v140, %v476
        %v478 = vand.u32 %v477, 4294901760
        %479 = vmatpush1.msra.mxu0 %v478
        %480 = vmatprep.subr.mxu0 0.0
        %481 = vmatpush2.msra.mxu0 0.0
        %482 = vmatprep.subr.mxu0 0.0
        %483 = vmatpush2.msra.mxu0 0.0
        %484 = vmatprep.subr.mxu0 0.0
        %485 = vmatpush2.msra.mxu0 0.0
        %486 = vmatprep.subr.mxu0 0.0
        %487 = vmatpush2.msra.mxu0 0.0
        %488 = vmatprep.subr.mxu0 0.0
        %489 = vmatpush2.msra.mxu0 0.0
        %490 = vmatprep.subr.mxu0 0.0
        %491 = vmatpush2.msra.mxu0 0.0
        %492 = vmatprep.subr.mxu0 0.0
        %493 = vmatpush2.msra.mxu0 0.0
        %494 = vmatprep.subr.mxu0 0.0
        %495 = vmatpush2.msra.mxu0 0.0
        %496 = vmatprep.subr.mxu0 0.0
        %497 = vmatpush2.msra.mxu0 0.0
        %498 = vmatprep.subr.mxu0 0.0
        %499 = vmatpush2.msra.mxu0 0.0
        %500 = vmatprep.subr.mxu0 0.0
        %501 = vmatpush2.msra.mxu0 0.0
        %502 = vmatprep.subr.mxu0 0.0
        %503 = vmatpush2.msra.mxu0 0.0
        %504 = vmatprep.subr.mxu0 0.0
        %505 = vmatpush2.msra.mxu0 0.0
        %506 = vmatprep.subr.mxu0 0.0
        %507 = vmatpush2.msra.mxu0 0.0
        %508 = vmatprep.subr.mxu0 0.0
        %509 = vmatpush2.msra.mxu0 0.0
        %510 = vmatprep.subr.mxu0 0.0
        %511 = vmatpush2.msra.mxu0 0.0
        %512 = vmatprep.mubr.f32.mxu0 0.0
        %v513 = vand.u32 %v143, 4294901760
        %514 = vmatmul.mubr.f32.gmra.mxu0 %v513
        %v515 = vpop.f32.mrf.mxu0
        %v516 = vadd.f32 %v442, %v515
        %v517 = vpop.f32.mrf.mxu0
        %518 = vdwg.mxu0
        %519 = vmatprep.subr.mxu0 0.0
        %520 = vmatpush1.msra.mxu0 0.0
        %521 = vmatprep.subr.mxu0 0.0
        %522 = vmatpush1.msra.mxu0 0.0
        %523 = vmatprep.subr.mxu0 0.0
        %524 = vmatpush1.msra.mxu0 0.0
        %525 = vmatprep.subr.mxu0 0.0
        %526 = vmatpush1.msra.mxu0 0.0
        %527 = vmatprep.subr.mxu0 0.0
        %528 = vmatpush1.msra.mxu0 0.0
        %529 = vmatprep.subr.mxu0 0.0
        %530 = vmatpush1.msra.mxu0 0.0
        %531 = vmatprep.subr.mxu0 0.0
        %532 = vmatpush1.msra.mxu0 0.0
        %533 = vmatprep.subr.mxu0 0.0
        %534 = vmatpush1.msra.mxu0 0.0
        %535 = vmatprep.subr.mxu0 0.0
        %536 = vmatpush1.msra.mxu0 0.0
        %537 = vmatprep.subr.mxu0 0.0
        %538 = vmatpush1.msra.mxu0 0.0
        %539 = vmatprep.subr.mxu0 0.0
        %540 = vmatpush1.msra.mxu0 0.0
        %541 = vmatprep.subr.mxu0 0.0
        %542 = vmatpush1.msra.mxu0 0.0
        %543 = vmatprep.subr.mxu0 0.0
        %544 = vmatpush1.msra.mxu0 0.0
        %545 = vmatprep.subr.mxu0 0.0
        %546 = vmatpush1.msra.mxu0 0.0
        %547 = vmatprep.subr.mxu0 0.0
        %548 = vmatpush1.msra.mxu0 0.0
        %549 = vmatprep.subr.mxu0 0.0
        %v550 = vand.u32 %v140, 4294901760
        %551 = vmatpush1.msra.mxu0 %v550
        %552 = vmatprep.subr.mxu0 0.0
        %553 = vmatpush2.msra.mxu0 0.0
        %554 = vmatprep.subr.mxu0 0.0
        %555 = vmatpush2.msra.mxu0 0.0
        %556 = vmatprep.subr.mxu0 0.0
        %557 = vmatpush2.msra.mxu0 0.0
        %558 = vmatprep.subr.mxu0 0.0
        %559 = vmatpush2.msra.mxu0 0.0
        %560 = vmatprep.subr.mxu0 0.0
        %561 = vmatpush2.msra.mxu0 0.0
        %562 = vmatprep.subr.mxu0 0.0
        %563 = vmatpush2.msra.mxu0 0.0
        %564 = vmatprep.subr.mxu0 0.0
        %565 = vmatpush2.msra.mxu0 0.0
        %566 = vmatprep.subr.mxu0 0.0
        %567 = vmatpush2.msra.mxu0 0.0
        %568 = vmatprep.subr.mxu0 0.0
        %569 = vmatpush2.msra.mxu0 0.0
        %570 = vmatprep.subr.mxu0 0.0
        %571 = vmatpush2.msra.mxu0 0.0
        %572 = vmatprep.subr.mxu0 0.0
        %573 = vmatpush2.msra.mxu0 0.0
        %574 = vmatprep.subr.mxu0 0.0
        %575 = vmatpush2.msra.mxu0 0.0
        %576 = vmatprep.subr.mxu0 0.0
        %577 = vmatpush2.msra.mxu0 0.0
        %578 = vmatprep.subr.mxu0 0.0
        %579 = vmatpush2.msra.mxu0 0.0
        %580 = vmatprep.subr.mxu0 0.0
        %581 = vmatpush2.msra.mxu0 0.0
        %582 = vmatprep.subr.mxu0 0.0
        %583 = vmatpush2.msra.mxu0 0.0
        %584 = vmatprep.mubr.f32.mxu0 0.0
        %v585 = vand.u32 %v143, 4294901760
        %586 = vmatmul.mubr.f32.gmra.mxu0 %v585
        %v587 = vpop.f32.mrf.mxu0
        %v588 = vadd.f32 %v516, %v587
        %v589 = vpop.f32.mrf.mxu0
        %590 = vdwg.mxu0
        %v591 = vmul.f32 %v588, 4.0
        %v592 = vadd.f32 %v591, 0.5
        %v593 = vfloor.f32 %v592
        %v594 = vsub.f32 %v591, %v593
        %v595 = vmul.f32 %v594, 1.5707964
        %v596 = vmul.f32 %v595, %v595
        %v597 = vmul.f32 %v596, -0.00019515296
        %v598 = vadd.f32 %v597, 0.008332161
        %v599 = vmul.f32 %v596, %v598
        %v600 = vadd.f32 %v599, -0.16666655
        %v601 = vmul.f32 %v596, %v600
        %v602 = vadd.f32 %v601, 1.0
        %v603 = vmul.f32 %v595, %v602
        %v604 = vmul.f32 %v596, 0.5
        %v605 = vsub.f32 1.0, %v604
        %v606 = vmul.f32 %v596, %v596
        %v607 = vmul.f32 %v596, 2.4433157e-05
        %v608 = vadd.f32 %v607, -0.0013887316
        %v609 = vmul.f32 %v596, %v608
        %v610 = vadd.f32 %v609, 0.041666646
        %v611 = vmul.f32 %v606, %v610
        %v612 = vadd.f32 %v605, %v611
        %v613 = vcvt.f32.s32.to.zero.pseudo %v593
        %v614 = vand.u32 %v613, 3
        %v615 = vand.u32 %v614, 1
        %vm616 = vcmp.eq.s32.totalorder %v615, 1
        %v617 = vsel %vm616, %v612, %v603
        %v618 = vsel %vm616, %v603, %v612
        %v619 = vand.u32 %v614, 2
        %vm620 = vcmp.eq.s32.totalorder %v619, 2
        %v621 = vsub.f32 0.0, %v617
        %v622 = vsel %vm620, %v621, %v617
        %v623 = vadd.s32 %v614, 1
        %v624 = vand.u32 %v623, 2
        %vm625 = vcmp.eq.s32.totalorder %v624, 2
        %v626 = vsub.f32 0.0, %v618
        %v627 = vsel %vm625, %v626, %v618
        %628 = vst [vmem:[%s134] sm:$0xff] %v622
        %629 = vst [vmem:[%s134 + $0x8] sm:$0xff] %v627
        %s630 = sand.u32 %s71, 1
        %s631 = scalar_lea.sflag [#allocation3], %s630
        %s632 = sand.u32 %s71, 1
        %s633 = smul.addr %s632, 16
        %s634 = scalar_lea.vmem [#allocation2], %s633
        // Predicated region
        $region29: #{tpu_custom_call.1} parent=27 // pred_check
          %p635 = pneg %p81
        $region30: #{tpu_custom_call.1} parent=27 // pred_check_branch
          %637 = sbr.rel (%p635) target = $region32
        $region31: #{tpu_custom_call.1} parent=27 // pred_region
          %s639 = ssub.s32 256, 256
          %640 = vsyncadd %s631, %s639
          %s641 = smul.addr %s16, 2
          %s642 = smul.addr %s641, 128
          %s643 = scalar_lea.hbm %s2, %s642
          %s645 = sshll.u32 %s634, 4
          %s646 = int_to_ptr.vmem [resolvable:$true] %s645
          %648 = dma.vmem_to_hbm [thread:$0]  %s646, 256, %s643, %s631
        $region32: #{tpu_custom_call.1} parent=27 // pred_fallthru
          _
      $region28: #{tpu_custom_call.1} parent=5 // pred_fallthru
        _
      %p649 = scmp.le.s32.totalorder 2, %s11
      // Predicated region
      $region33: #{tpu_custom_call.1} parent=5 // pred_check
        %p650 = pneg %p649
      $region34: #{tpu_custom_call.1} parent=5 // pred_check_branch
        %652 = sbr.rel (%p650) target = $region36
      $region35: #{tpu_custom_call.1} parent=5 // pred_region
        %s653 = ssub.s32 %s11, 2
        // Predicated region
        $region37: #{tpu_custom_call.1} parent=35 // pred_check
          %p654 = pneg %p87
        $region38: #{tpu_custom_call.1} parent=35 // pred_check_branch
          %656 = sbr.rel (%p654) target = $region40
        $region39: #{tpu_custom_call.1} parent=35 // pred_region
          %s657 = sand.u32 %s72, 1
          %s658 = scalar_lea.sflag [#allocation3], %s657
          %s659 = sand.u32 %s72, 1
          %s660 = smul.addr %s659, 16
          %s661 = scalar_lea.vmem [#allocation2], %s660
          %662 = dma.done %s658, 256
        $region40: #{tpu_custom_call.1} parent=35 // pred_fallthru
          _
      $region36: #{tpu_custom_call.1} parent=5 // pred_fallthru
        _
    $region6: #{tpu_custom_call.1} parent=1 // loop_footer
      %s15 = sadd.s32 1, %s11
    $region7: #{tpu_custom_call.1} parent=1 // loop_footer_branch
      %10 = sbr.rel target = $region3
    $region8: #{tpu_custom_call.1} parent=1 // loop_exit
      _
    %663 = vsyncpa [#allocation3], 1
    %s664 = scalar_lea.sflag [#allocation3], 1
    %665 = vsyncpa %s664, 1

</llo_original>
